<compile_context>
chip_gen: v6e
topology: v6e:2x2x1
jax: 0.10.0
libtpu: 0.0.40
codegen_flags: <defaults>
</compile_context>

<pallas_src>
import jax
import jax.numpy as jnp
from jax.experimental import pallas as pl
from jax.experimental.pallas import tpu as pltpu


_TARGET_BLOCK_BYTES = 4 * 1024 * 1024


def _round_up(x, m):
    return ((x + m - 1) // m) * m


def _sublane(itemsize):
    return {4: 8, 2: 16, 1: 32}.get(itemsize, 8)


def _model_1_1_kernel(scalars_ref, kdim_ref, x_ref, out_ref):
    """scalars_ref: SMEM (2,) f32  = [scale, offset] = [Param/T, C*Bias]
       kdim_ref:    SMEM (1,) i32  = [K] (true length of the flattened axis)
       x_ref:       VMEM (TB, TK) tile of the flattened (B, C*T) trace
       out_ref:     VMEM (TB, 1) f32 per-row accumulator (resident across k)
    """
    k = pl.program_id(1)
    nk = pl.num_programs(1)

    @pl.when(k == 0)
    def _init():
        out_ref[...] = jnp.zeros_like(out_ref)

    x = x_ref[...].astype(jnp.float32)     # per-tile cast in VMEM (free, VPU slack)
    tk = x_ref.shape[1]

    @pl.when(k < nk - 1)
    def _body():
        # Interior chunks are always fully in-bounds (only the last can overhang K).
        out_ref[...] += jnp.sum(x, axis=1, keepdims=True)

    @pl.when(k == nk - 1)
    def _last():
        # Mask the (possibly partial) final chunk against the true K, then
        # apply the fused affine epilogue: out = (Param/T) * rowsum + C*Bias.
        lane = jax.lax.broadcasted_iota(jnp.int32, x.shape, 1) + k * tk
        xm = jnp.where(lane < kdim_ref[0], x, jnp.float32(0.0))
        acc = out_ref[...] + jnp.sum(xm, axis=1, keepdims=True)
        out_ref[...] = acc * scalars_ref[0] + scalars_ref[1]


def _choose_tiles(B, K, itemsize, target_block_bytes=_TARGET_BLOCK_BYTES):
    """Pick (TB, TK).  TK first (full K when it fits the block budget), then
    grow TB to fill ~4 MiB; finally split rows so v7x's 2 TCs both get work."""
    sub = _sublane(itemsize)

    tb = B if B <= sub else sub

    if K <= 128 or K * sub * itemsize <= target_block_bytes:
        tk = K                                    # single K block: no mask, no k-grid
        if B > sub:
            tb_budget = max(sub, target_block_bytes // max(1, K * itemsize))
            tb_budget = max(sub, (tb_budget // sub) * sub)
            tb = min(_round_up(B, sub), tb_budget, 2048)
    else:
        tk = max(128, ((target_block_bytes // (max(tb, 1) * itemsize)) // 128) * 128)
        tk = min(tk, _round_up(K, 128))

    # v7x megacore: guarantee >= 2 blocks on the "parallel" rows axis when B allows.
    if (B + tb - 1) // tb < 2 and B >= 2 * sub:
        tb = max(sub, _round_up((B + 1) // 2, sub))

    return tb, tk


def model_1_1_forward(trace, aux, param, bias, unnorm=False, *, tiles=None):
    """JAX/Pallas equivalent of Model_1_1.forward.

    trace: (B, C, T) in any float dtype (f32 / bf16); aux is unused.
    param, bias: learned scalars.
    """
    del aux  # unused in the reference forward
    B, C, T = trace.shape
    K = C * T

    # Flatten to (B, C*T): contiguous metadata-only reshape, keeps the
    # reduction axis lane-dense.  Native dtype (no HBM-side cast/copy).
    x = jnp.reshape(trace, (B, K))
    itemsize = jnp.dtype(x.dtype).itemsize
    sub = _sublane(itemsize)

    if tiles is None:
        TB, TK = _choose_tiles(B, K, itemsize)
    else:
        # Validate user tiles: multiples of the sublane tile / 128 unless they
        # equal the full dims.
        TB, TK = tiles
        if TB != B:
            TB = max(sub, _round_up(min(TB, B), sub))
        if TK != K:
            TK = max(128, _round_up(min(TK, K), 128))

    # Fused affine epilogue constants: out = (param / T) * rowsum + C * bias.
    scale = jnp.asarray(param, jnp.float32) / jnp.float32(T)
    offset = jnp.asarray(bias, jnp.float32) * jnp.float32(C)
    scalars = jnp.stack([scale, offset])
    kdim = jnp.asarray([K], jnp.int32)

    grid = ((B + TB - 1) // TB, (K + TK - 1) // TK)

    out2d = pl.pallas_call(
        _model_1_1_kernel,
        out_shape=jax.ShapeDtypeStruct((B, 1), jnp.float32),
        grid=grid,
        in_specs=[
            pl.BlockSpec(memory_space=pltpu.MemorySpace.SMEM),   # [scale, offset]
            pl.BlockSpec(memory_space=pltpu.MemorySpace.SMEM),   # [K]
            pl.BlockSpec((TB, TK), lambda i, k: (i, k)),         # trace tiles
        ],
        out_specs=pl.BlockSpec((TB, 1), lambda i, k: (i, 0)),    # per-row accumulator
        compiler_params=pltpu.CompilerParams(
            dimension_semantics=("parallel", "arbitrary"),       # rows megacore-sharded
        ),
        cost_estimate=pl.CostEstimate(
            flops=B * K + 2 * B,
            transcendentals=0,
            bytes_accessed=itemsize * B * K + 4 * B + 12,
        ),
    )(scalars, kdim, x)

    out = out2d[:, 0]

    if unnorm:
        # UnnormaliseY: Y -> 10**(Y * log10(101)) - 1 (cheap glue, plain JAX)
        out = 10.0 ** (out * jnp.log10(jnp.float32(101.0))) - 1.0
    return out


def _reference_forward(trace, param, bias):
    m = jnp.mean(trace.astype(jnp.float32), axis=2)
    y = m * param + bias
    return jnp.sum(y, axis=1)


if __name__ == "__main__":
    key = jax.random.PRNGKey(0)
    k1, k2, k3 = jax.random.split(key, 3)

    # Parameter init matching nn.Parameter(torch.tensor(1.0)) / (0.0)
    param = jnp.float32(1.0)
    bias = jnp.float32(0.0)

    # Small shape consistent with the module: batch=2, channels=4, time=16.
    B, C, T = 2, 4, 16
    trace = jax.random.normal(k1, (B, C, T), dtype=jnp.float32)
    aux = jax.random.normal(k2, (B, 4), dtype=jnp.float32)   # unused, as in reference

    out = model_1_1_forward(trace, aux, param, bias, unnorm=False)
    out = jax.block_until_ready(out)
    ref = _reference_forward(trace, param, bias)
    assert out.shape == (B,)
    assert jnp.allclose(out, ref, atol=1e-5, rtol=1e-5), (out, ref)

    # Unnorm path (plain-JAX epilogue).
    out_un = jax.block_until_ready(model_1_1_forward(trace, aux, param, bias, unnorm=True))
    ref_un = 10.0 ** (ref * jnp.log10(jnp.float32(101.0))) - 1.0
    assert jnp.allclose(out_un, ref_un, atol=1e-4, rtol=1e-4), (out_un, ref_un)

    # Forced small tiles: exercises the multi-chunk reduction with the in-kernel
    # lane mask (K=400 not a multiple of 128) and a partial row block (B=20, TB=8).
    B2, C2, T2 = 20, 4, 100
    trace2 = jax.random.normal(k3, (B2, C2, T2), dtype=jnp.float32)
    p2, b2 = jnp.float32(0.75), jnp.float32(-0.5)
    out2 = jax.block_until_ready(
        model_1_1_forward(trace2, None, p2, b2, unnorm=False, tiles=(8, 128)))
    ref2 = _reference_forward(trace2, p2, b2)
    assert jnp.allclose(out2, ref2, atol=1e-4, rtol=1e-4), (out2, ref2)

    # Native bf16 input path: no wrapper cast, f32 accumulation in-kernel.
    trace3 = trace2.astype(jnp.bfloat16)
    out3 = jax.block_until_ready(model_1_1_forward(trace3, None, p2, b2))
    ref3 = _reference_forward(trace3, p2, b2)
    assert jnp.allclose(out3, ref3, atol=1e-2, rtol=1e-2), (out3, ref3)

    print("KERNEL_OK")
</pallas_src>

<mosaic_0001>
module attributes {stable_mosaic.version = 11 : i64} {
  func.func @_model_1_1_kernel(%arg0: i32, %arg1: i32, %arg2: memref<2xf32, #tpu.memory_space<smem>>, %arg3: memref<1xi32, #tpu.memory_space<smem>>, %arg4: memref<2x64xf32, #tpu.memory_space<vmem>>, %arg5: memref<2x1xf32, #tpu.memory_space<vmem>>) attributes {dimension_semantics = [#tpu.dimension_semantics<parallel>, #tpu.dimension_semantics<arbitrary>], iteration_bounds = array<i64: 1, 1>, scalar_prefetch = 0 : i64, scratch_operands = 0 : i64, tpu.core_type = #tpu.core_type<tc>, window_params = [{transform_indices = @transform_0, window_bounds = array<i64: 2>}, {transform_indices = @transform_1, window_bounds = array<i64: 1>}, {transform_indices = @transform_2, window_bounds = array<i64: 2, 64>}, {transform_indices = @transform_3, window_bounds = array<i64: 2, 1>}]} {
    %c0_i32 = arith.constant 0 : i32
    %0 = arith.cmpi eq, %arg1, %c0_i32 : i32
    %1 = arith.extui %0 : i1 to i32
    %c0_i32_0 = arith.constant 0 : i32
    %2 = arith.cmpi ne, %1, %c0_i32_0 : i32
    scf.if %2 {
      %cst = arith.constant 0.000000e+00 : f32
      %10 = vector.broadcast %cst : f32 to vector<2x1xf32>
      %c0_6 = arith.constant 0 : index
      %c0_7 = arith.constant 0 : index
      %11 = vector.load %arg5[%c0_6, %c0_7] : memref<2x1xf32, #tpu.memory_space<vmem>>, vector<2x1xf32>
      tpu.vector_store %arg5[%c0_6, %c0_7], %10 {strides = array<i32>} : memref<2x1xf32, #tpu.memory_space<vmem>>, vector<2x1xf32>,
    } else {
    }
    %c0 = arith.constant 0 : index
    %c0_1 = arith.constant 0 : index
    %3 = vector.load %arg4[%c0, %c0_1] : memref<2x64xf32, #tpu.memory_space<vmem>>, vector<2x64xf32>
    %c0_i32_2 = arith.constant 0 : i32
    %4 = arith.cmpi slt, %arg1, %c0_i32_2 : i32
    %5 = arith.extui %4 : i1 to i32
    %c0_i32_3 = arith.constant 0 : i32
    %6 = arith.cmpi ne, %5, %c0_i32_3 : i32
    scf.if %6 {
      %c0_6 = arith.constant 0 : index
      %c0_7 = arith.constant 0 : index
      %10 = vector.load %arg5[%c0_6, %c0_7] : memref<2x1xf32, #tpu.memory_space<vmem>>, vector<2x1xf32>
      %cst = arith.constant dense<0.000000e+00> : vector<2xf32>
      %11 = vector.multi_reduction <add>, %3, %cst [1] : vector<2x64xf32> to vector<2xf32>
      %12 = vector.shape_cast %11 : vector<2xf32> to vector<2x1xf32>
      %13 = arith.addf %10, %12 : vector<2x1xf32>
      %c0_8 = arith.constant 0 : index
      %c0_9 = arith.constant 0 : index
      %14 = vector.load %arg5[%c0_8, %c0_9] : memref<2x1xf32, #tpu.memory_space<vmem>>, vector<2x1xf32>
      tpu.vector_store %arg5[%c0_8, %c0_9], %13 {strides = array<i32>} : memref<2x1xf32, #tpu.memory_space<vmem>>, vector<2x1xf32>,
    } else {
    }
    %c0_i32_4 = arith.constant 0 : i32
    %7 = arith.cmpi eq, %arg1, %c0_i32_4 : i32
    %8 = arith.extui %7 : i1 to i32
    %c0_i32_5 = arith.constant 0 : i32
    %9 = arith.cmpi ne, %8, %c0_i32_5 : i32
    scf.if %9 {
      %10 = tpu.iota {dimensions = array<i32: 1>} : vector<2x64xi32>
      %c64_i32 = arith.constant 64 : i32
      %11 = arith.muli %arg1, %c64_i32 : i32
      %12 = vector.broadcast %11 : i32 to vector<2x64xi32>
      %13 = arith.addi %10, %12 : vector<2x64xi32>
      %c0_6 = arith.constant 0 : index
      %14 = memref.load %arg3[%c0_6] : memref<1xi32, #tpu.memory_space<smem>>
      %15 = vector.broadcast %14 : i32 to vector<2x64xi32>
      %16 = arith.cmpi slt, %13, %15 : vector<2x64xi32>
      %cst = arith.constant 0.000000e+00 : f32
      %17 = vector.broadcast %cst : f32 to vector<2x64xf32>
      %18 = arith.select %16, %3, %17 : vector<2x64xi1>, vector<2x64xf32>
      %c0_7 = arith.constant 0 : index
      %c0_8 = arith.constant 0 : index
      %19 = vector.load %arg5[%c0_7, %c0_8] : memref<2x1xf32, #tpu.memory_space<vmem>>, vector<2x1xf32>
      %cst_9 = arith.constant dense<0.000000e+00> : vector<2xf32>
      %20 = vector.multi_reduction <add>, %18, %cst_9 [1] : vector<2x64xf32> to vector<2xf32>
      %21 = vector.shape_cast %20 : vector<2xf32> to vector<2x1xf32>
      %22 = arith.addf %19, %21 : vector<2x1xf32>
      %c0_10 = arith.constant 0 : index
      %23 = memref.load %arg2[%c0_10] : memref<2xf32, #tpu.memory_space<smem>>
      %24 = vector.broadcast %23 : f32 to vector<2x1xf32>
      %25 = arith.mulf %22, %24 : vector<2x1xf32>
      %c1 = arith.constant 1 : index
      %26 = memref.load %arg2[%c1] : memref<2xf32, #tpu.memory_space<smem>>
      %27 = vector.broadcast %26 : f32 to vector<2x1xf32>
      %28 = arith.addf %25, %27 : vector<2x1xf32>
      %c0_11 = arith.constant 0 : index
      %c0_12 = arith.constant 0 : index
      %29 = vector.load %arg5[%c0_11, %c0_12] : memref<2x1xf32, #tpu.memory_space<vmem>>, vector<2x1xf32>
      tpu.vector_store %arg5[%c0_11, %c0_12], %28 {strides = array<i32>} : memref<2x1xf32, #tpu.memory_space<vmem>>, vector<2x1xf32>,
    } else {
    }
    return
  }
  func.func @transform_0(%arg0: i32, %arg1: i32) -> i32 {
    %c0_i32 = arith.constant 0 : i32
    %c0_i32_0 = arith.constant 0 : i32
    return %c0_i32 : i32
  }
  func.func @transform_1(%arg0: i32, %arg1: i32) -> i32 {
    %c0_i32 = arith.constant 0 : i32
    %c0_i32_0 = arith.constant 0 : i32
    return %c0_i32 : i32
  }
  func.func @transform_2(%arg0: i32, %arg1: i32) -> (i32, i32) {
    %c0_i32 = arith.constant 0 : i32
    return %arg0, %arg1 : i32, i32
  }
  func.func @transform_3(%arg0: i32, %arg1: i32) -> (i32, i32) {
    %c0_i32 = arith.constant 0 : i32
    %c0_i32_0 = arith.constant 0 : i32
    return %arg0, %c0_i32 : i32, i32
  }
}

</mosaic_0001>

<llo_original>
// kernel: tpu_custom_call.1
$region0: #{tpu_custom_call.1}
  #allocation0 [shape = 'u32[]', space=smem, size = 0x4, offset = 0x4, fixed_abs, tag = 'smem constant byte address 0x4 - core index']
  #allocation1 [shape = 'u32[144,128]{1,0:T(1,128)}', space=vmem, size = 0x12000, scoped, tag = 'internal scratch']
  #allocation2 [shape = 's32[1]{0:T(128)S(6)}', space=smem, size = 0x200, scoped, tag = 'scoped memory for tpu_custom_call.1']
  %s0 = inlined_call_operand.vmem [shape: f32[2], index: 0, kind: input, shape index: {}]
  %s1 = inlined_call_operand.<no memory space> [shape: s32[1], index: 1, kind: input, shape index: {}]
  %s2 = inlined_call_operand.vmem [shape: f32[2,64], index: 2, kind: input, shape index: {}]
  %s3 = inlined_call_operand.vmem [shape: f32[2,1], index: 3, kind: output, shape index: {}]
  %s4 = sld [smem:[#allocation0]]
  $region38: #{tpu_custom_call.1} parent=0
    _
  %s6 = ssub.s32 1, %s4
  %s7 = scalar_select 0, %s6, %s4
  %8 = sst [smem:[#allocation2]] %s1
  $region1: #{tpu_custom_call.1} parent=0
    #allocation3 [shape = 'u8[512]{0}', space=smem, size = 0x200, scoped, tag = 'input window, operand 0, single buffered']
    #allocation4 [shape = 's32[1]{0}', space=sflag, size = 0x4, scoped, tag = 'scoped memory for tpu_custom_call.1']
    %9 = vsyncpa [#allocation4], 0
    // Predicated region
    $region2: #{tpu_custom_call.1} parent=1 // pred_check
      _
    $region3: #{tpu_custom_call.1} parent=1 // pred_check_branch
      %11 = sbr.rel (0) target = $region5
    $region4: #{tpu_custom_call.1} parent=1 // pred_region
      %s13 = ssub.s32 16, 16
      %14 = vsyncadd [#allocation4], %s13
      %s16 = sshll.u32 %s0, 4
      %s17 = int_to_ptr.vmem [resolvable:$true] %s16
      %19 = dma.vmem_to_smem %s17, 16, [#allocation3], [#allocation4]
    $region5: #{tpu_custom_call.1} parent=1 // pred_fallthru
      _
    // Predicated region
    $region6: #{tpu_custom_call.1} parent=1 // pred_check
      _
    $region7: #{tpu_custom_call.1} parent=1 // pred_check_branch
      %21 = sbr.rel (0) target = $region9
    $region8: #{tpu_custom_call.1} parent=1 // pred_region
      _
    $region9: #{tpu_custom_call.1} parent=1 // pred_fallthru
      _
    // Predicated region
    $region10: #{tpu_custom_call.1} parent=1 // pred_check
      _
    $region11: #{tpu_custom_call.1} parent=1 // pred_check_branch
      %23 = sbr.rel (0) target = $region13
    $region12: #{tpu_custom_call.1} parent=1 // pred_region
      _
    $region13: #{tpu_custom_call.1} parent=1 // pred_fallthru
      _
    // Predicated region
    $region14: #{tpu_custom_call.1} parent=1 // pred_check
      _
    $region15: #{tpu_custom_call.1} parent=1 // pred_check_branch
      %25 = sbr.rel (0) target = $region17
    $region16: #{tpu_custom_call.1} parent=1 // pred_region
      %26 = dma.done [#allocation4], 16
    $region17: #{tpu_custom_call.1} parent=1 // pred_fallthru
      _
    %27 = sfence
    %p28 = scmp.eq.s32.totalorder 0, 0
    // Predicated region
    $region18: #{tpu_custom_call.1} parent=1 // pred_check
      %p29 = pneg %p28
    $region19: #{tpu_custom_call.1} parent=1 // pred_check_branch
      %31 = sbr.rel (%p29) target = $region21
    $region20: #{tpu_custom_call.1} parent=1 // pred_region
      %vm32 = vcmask 1024
      %33 = vst.msk [vmem:[%s3] sm:$0x3] %vm32, 0.0
    $region21: #{tpu_custom_call.1} parent=1 // pred_fallthru
      _
    %v34 = vld [vmem:[%s2] sm:$0x3]
    %p35 = scmp.lt.s32.totalorder 0, 0
    // Predicated region
    $region22: #{tpu_custom_call.1} parent=1 // pred_check
      %p36 = pneg %p35
    $region23: #{tpu_custom_call.1} parent=1 // pred_check_branch
      %38 = sbr.rel (%p36) target = $region25
    $region24: #{tpu_custom_call.1} parent=1 // pred_region
      %v39 = vld [vmem:[%s3] sm:$0x3]
      %vm40 = vcmask 517120
      %v41 = vsel %vm40, %v34, 0.0
      %42 = vadd.xlane.f32.xlu0 %v41
      %v43 = vpop.xlane.xlu0 %42
      %v44 = vadd.f32 %v39, %v43
      %vm45 = vcmask 1024
      %46 = vst.msk [vmem:[%s3] sm:$0x3] %vm45, %v44
    $region25: #{tpu_custom_call.1} parent=1 // pred_fallthru
      _
    // Predicated region
    $region26: #{tpu_custom_call.1} parent=1 // pred_check
      %p47 = pneg %p28
    $region27: #{tpu_custom_call.1} parent=1 // pred_check_branch
      %49 = sbr.rel (%p47) target = $region29
    $region28: #{tpu_custom_call.1} parent=1 // pred_region
      %v50 = vlaneseq
      %v51 = vand.u32 %v50, 127
      %s52 = smul.u32 0, 64
      %v53 = vstv %s52
      %v54 = vadd.s32 %v51, %v53
      %s55 = sld [smem:[#allocation2]]
      %v56 = vstv %s55
      %vm57 = vcmp.lt.s32.totalorder %v54, %v56
      %v58 = vsel %vm57, %v34, 0.0
      %v59 = vld [vmem:[%s3] sm:$0x3]
      %vm60 = vcmask 517120
      %v61 = vsel %vm60, %v58, 0.0
      %62 = vadd.xlane.f32.xlu0 %v61
      %v63 = vpop.xlane.xlu0 %62
      %v64 = vadd.f32 %v59, %v63
      %s65 = sld [smem:[#allocation3]]
      %v66 = vstv %s65
      %v67 = vmul.f32 %v64, %v66
      %s68 = sld [smem:[#allocation3 + $0x1]]
      %v69 = vstv %s68
      %v70 = vadd.f32 %v67, %v69
      %vm71 = vcmask 1024
      %72 = vst.msk [vmem:[%s3] sm:$0x3] %vm71, %v70
    $region29: #{tpu_custom_call.1} parent=1 // pred_fallthru
      _
    // Predicated region
    $region30: #{tpu_custom_call.1} parent=1 // pred_check
      _
    $region31: #{tpu_custom_call.1} parent=1 // pred_check_branch
      %74 = sbr.rel (0) target = $region33
    $region32: #{tpu_custom_call.1} parent=1 // pred_region
      _
    $region33: #{tpu_custom_call.1} parent=1 // pred_fallthru
      _
    // Predicated region
    $region34: #{tpu_custom_call.1} parent=1 // pred_check
      _
    $region35: #{tpu_custom_call.1} parent=1 // pred_check_branch
      %76 = sbr.rel (0) target = $region37
    $region36: #{tpu_custom_call.1} parent=1 // pred_region
      _
    $region37: #{tpu_custom_call.1} parent=1 // pred_fallthru
      _
    %77 = vsyncpa [#allocation4], 1

</llo_original>
